<compile_context>
chip_gen: v7x
topology: tpu7x:2x2x1
jax: 0.10.0
libtpu: 0.0.40
codegen_flags: <defaults>
</compile_context>

<pallas_src>
import jax
import jax.numpy as jnp
from jax.experimental import pallas as pl
from jax.experimental.pallas import tpu as pltpu


def _make_encoder_rnn_kernel(T: int):
    """Build a fused kernel that runs the whole T-step tanh-RNN recurrence."""

    def kernel(x_ref,      # (T, H)  gathered embedding rows, bf16 (VMEM)
               h0_ref,     # (1, H)  initial hidden state, f32 (VMEM)
               wih_ref,    # (H, H)  W_ih^T, bf16 (VMEM-resident)
               whh_ref,    # (H, H)  W_hh^T, bf16 (VMEM-resident)
               b_ref,      # (1, H)  b_ih + b_hh, f32 (VMEM-resident)
               out_ref):   # (T, H)  h_t for every step, f32 (one HBM slab)
        # Non-recurrent input projection for ALL tokens in one MXU matmul.
        pre_x = jnp.dot(x_ref[...], wih_ref[...],
                        preferred_element_type=jnp.float32) + b_ref[...]   # (T,H) f32

        # Sequential recurrence, fully unrolled (T is small and static).
        h = h0_ref[...]                                                    # (1,H) f32
        for t in range(T):
            rec = jnp.dot(h.astype(jnp.bfloat16), whh_ref[...],
                          preferred_element_type=jnp.float32)              # (1,H) f32
            h = jnp.tanh(pre_x[t:t + 1, :] + rec)                          # f32 tanh
            # Static-index store into the VMEM output buffer; the HBM
            # writeback happens once for the whole (T, H) slab.
            out_ref[pl.ds(t, 1), :] = h

    return kernel


def pack_params(raw):
    """One-time parameter prep outside the hot path: transpose & fuse biases."""
    return {
        "emb": raw["emb"].astype(jnp.bfloat16),                          # (V, H)
        "w_ih_t": raw["w_ih"].T.astype(jnp.bfloat16),                    # (H, H)
        "w_hh_t": raw["w_hh"].T.astype(jnp.bfloat16),                    # (H, H)
        "b": (raw["b_ih"] + raw["b_hh"]).astype(jnp.float32)[None, :],   # (1, H)
    }


@jax.jit
def encoder_rnn_sequence(token_ids, hidden0, packed):
    """Run the EncoderCell recurrence over a whole token sequence in ONE call.

    token_ids: int32 (T,)
    hidden0  : f32 (n_layers=1, 1, H)
    returns  : (outputs (T, 1, H) f32, final hidden (1, 1, H) f32)
    """
    emb = packed["emb"]
    wih_t, whh_t, b = packed["w_ih_t"], packed["w_hh_t"], packed["b"]
    V, H = emb.shape
    T = token_ids.shape[0]

    # Pre-gather embedding rows (tiny one-shot XLA gather, replaces T per-step
    # data-dependent 128-byte DMAs).  Dropout (eval mode) is identity.
    x_slab = jnp.take(emb, token_ids, axis=0)                 # (T, H) bf16
    h0 = hidden0.reshape(1, H).astype(jnp.float32)

    vmem = pltpu.MemorySpace.VMEM
    outs = pl.pallas_call(
        _make_encoder_rnn_kernel(T),
        out_shape=jax.ShapeDtypeStruct((T, H), jnp.float32),
        in_specs=[pl.BlockSpec(memory_space=vmem)] * 5,
        out_specs=pl.BlockSpec(memory_space=vmem),
    )(x_slab, h0, wih_t, whh_t, b)

    outputs = outs.reshape(T, 1, H)
    hidden_final = outs[T - 1:T].reshape(1, 1, H)
    return outputs, hidden_final


def encoder_cell_forward(token_idx, hidden, packed):
    """Single-step forward matching PyTorch EncoderCell.forward(input, hidden).

    token_idx: int32 (1,);  hidden: f32 (1, 1, H)
    returns (output (1,1,H), hidden (1,1,H)) -- identical for a 1-layer tanh RNN.
    """
    outputs, hidden_new = encoder_rnn_sequence(token_idx, hidden, packed)
    H = hidden.shape[-1]
    return outputs.reshape(1, 1, H), hidden_new


def init_params(key, vocab_size, hidden_size):
    """Deterministic synthetic parameters matching nn.Embedding + nn.RNN shapes."""
    k_emb, k_wih, k_whh, k_bih, k_bhh = jax.random.split(key, 5)
    bound = 1.0 / jnp.sqrt(jnp.float32(hidden_size))
    return {
        "emb": jax.random.normal(k_emb, (vocab_size, hidden_size), jnp.float32),
        "w_ih": jax.random.uniform(k_wih, (hidden_size, hidden_size),
                                   jnp.float32, -bound, bound),
        "w_hh": jax.random.uniform(k_whh, (hidden_size, hidden_size),
                                   jnp.float32, -bound, bound),
        "b_ih": jax.random.uniform(k_bih, (hidden_size,), jnp.float32,
                                   -bound, bound),
        "b_hh": jax.random.uniform(k_bhh, (hidden_size,), jnp.float32,
                                   -bound, bound),
    }


def _ref_sequence(token_ids, hidden0, raw):
    """Pure-JAX reference mirroring the kernel's bf16-operand math exactly."""
    H = raw["w_ih"].shape[0]
    wih_t = raw["w_ih"].T.astype(jnp.bfloat16).astype(jnp.float32)
    whh_t = raw["w_hh"].T.astype(jnp.bfloat16).astype(jnp.float32)
    b = (raw["b_ih"] + raw["b_hh"]).astype(jnp.float32)
    x_all = raw["emb"][token_ids].astype(jnp.bfloat16).astype(jnp.float32)   # (T,H)
    pre_x = x_all @ wih_t + b
    h = hidden0.reshape(1, H).astype(jnp.float32)
    outs = []
    for t in range(int(token_ids.shape[0])):
        hb = h.astype(jnp.bfloat16).astype(jnp.float32)
        h = jnp.tanh(pre_x[t:t + 1] + hb @ whh_t)
        outs.append(h)
    return jnp.stack(outs, axis=0).reshape(-1, 1, H), h.reshape(1, 1, H)


if __name__ == "__main__":
    VOCAB = 16       # input_size (embedding vocab)
    HIDDEN = 32      # hidden_size
    N_LAYERS = 1
    SEQ = 8          # tokens processed by the fused-sequence call

    key = jax.random.PRNGKey(0)
    k_params, k_tok = jax.random.split(key)
    raw_params = init_params(k_params, VOCAB, HIDDEN)
    packed = pack_params(raw_params)

    token_ids = jax.random.randint(k_tok, (SEQ,), 0, VOCAB, dtype=jnp.int32)
    hidden0 = jnp.zeros((N_LAYERS, 1, HIDDEN), jnp.float32)   # init_hidden()

    # Fused whole-sequence call (the performance path).
    outputs, hidden_T = encoder_rnn_sequence(token_ids, hidden0, packed)
    jax.block_until_ready((outputs, hidden_T))

    ref_out, ref_h = _ref_sequence(token_ids, hidden0, raw_params)
    assert outputs.shape == (SEQ, 1, HIDDEN) and hidden_T.shape == (1, 1, HIDDEN)
    assert jnp.allclose(outputs, ref_out, atol=1e-3, rtol=1e-3), \
        "sequence output mismatch"
    assert jnp.allclose(hidden_T, ref_h, atol=1e-3, rtol=1e-3), \
        "final hidden mismatch"

    # Single-step API matching PyTorch EncoderCell.forward(input, hidden).
    out1, h1 = encoder_cell_forward(token_ids[:1], hidden0, packed)
    jax.block_until_ready((out1, h1))
    assert out1.shape == (1, 1, HIDDEN) and h1.shape == (1, 1, HIDDEN)
    assert jnp.allclose(out1, ref_out[0].reshape(1, 1, HIDDEN),
                        atol=1e-3, rtol=1e-3), "single-step output mismatch"

    print("KERNEL_OK")
</pallas_src>

<mosaic_0001>
module attributes {stable_mosaic.version = 11 : i64} {
  func.func @kernel(%arg0: memref<8x32xbf16, #tpu.memory_space<vmem>>, %arg1: memref<1x32xf32, #tpu.memory_space<vmem>>, %arg2: memref<32x32xbf16, #tpu.memory_space<vmem>>, %arg3: memref<32x32xbf16, #tpu.memory_space<vmem>>, %arg4: memref<1x32xf32, #tpu.memory_space<vmem>>, %arg5: memref<8x32xf32, #tpu.memory_space<vmem>>) attributes {dimension_semantics = [], scalar_prefetch = 0 : i64, scratch_operands = 0 : i64, tpu.core_type = #tpu.core_type<tc>} {
    %c0 = arith.constant 0 : index
    %c0_0 = arith.constant 0 : index
    %0 = vector.load %arg0[%c0, %c0_0] : memref<8x32xbf16, #tpu.memory_space<vmem>>, vector<8x32xbf16>
    %c0_1 = arith.constant 0 : index
    %c0_2 = arith.constant 0 : index
    %1 = vector.load %arg2[%c0_1, %c0_2] : memref<32x32xbf16, #tpu.memory_space<vmem>>, vector<32x32xbf16>
    %cst = arith.constant dense<0.000000e+00> : vector<8x32xf32>
    %2 = tpu.matmul %0, %1, %cst {dimension_numbers = #tpu.dot_dimension_numbers<[1], [0], [0], [1], [0, 0, 1, 1], [], []>} : vector<8x32xbf16>, vector<32x32xbf16>, vector<8x32xf32> -> vector<8x32xf32>
    %c0_3 = arith.constant 0 : index
    %c0_4 = arith.constant 0 : index
    %3 = vector.load %arg4[%c0_3, %c0_4] : memref<1x32xf32, #tpu.memory_space<vmem>>, vector<1x32xf32>
    %4 = vector.broadcast %3 : vector<1x32xf32> to vector<8x32xf32>
    %5 = arith.addf %2, %4 : vector<8x32xf32>
    %c0_5 = arith.constant 0 : index
    %c0_6 = arith.constant 0 : index
    %6 = vector.load %arg1[%c0_5, %c0_6] : memref<1x32xf32, #tpu.memory_space<vmem>>, vector<1x32xf32>
    %7 = arith.truncf %6 : vector<1x32xf32> to vector<1x32xbf16>
    %c0_7 = arith.constant 0 : index
    %c0_8 = arith.constant 0 : index
    %8 = vector.load %arg3[%c0_7, %c0_8] : memref<32x32xbf16, #tpu.memory_space<vmem>>, vector<32x32xbf16>
    %cst_9 = arith.constant dense<0.000000e+00> : vector<1x32xf32>
    %9 = tpu.matmul %7, %8, %cst_9 {dimension_numbers = #tpu.dot_dimension_numbers<[1], [0], [0], [1], [0, 0, 1, 1], [], []>} : vector<1x32xbf16>, vector<32x32xbf16>, vector<1x32xf32> -> vector<1x32xf32>
    %10 = vector.extract_strided_slice %5 {offsets = [0, 0], sizes = [1, 32], strides = [1, 1]} : vector<8x32xf32> to vector<1x32xf32>
    %11 = arith.addf %10, %9 : vector<1x32xf32>
    %12 = math.tanh %11 : vector<1x32xf32>
    %c0_10 = arith.constant 0 : index
    %c0_11 = arith.constant 0 : index
    %13 = vector.load %arg5[%c0_10, %c0_11] : memref<8x32xf32, #tpu.memory_space<vmem>>, vector<1x32xf32>
    tpu.vector_store %arg5[%c0_10, %c0_11], %12 {strides = array<i32>} : memref<8x32xf32, #tpu.memory_space<vmem>>, vector<1x32xf32>,
    %14 = arith.truncf %12 : vector<1x32xf32> to vector<1x32xbf16>
    %c0_12 = arith.constant 0 : index
    %c0_13 = arith.constant 0 : index
    %15 = vector.load %arg3[%c0_12, %c0_13] : memref<32x32xbf16, #tpu.memory_space<vmem>>, vector<32x32xbf16>
    %cst_14 = arith.constant dense<0.000000e+00> : vector<1x32xf32>
    %16 = tpu.matmul %14, %15, %cst_14 {dimension_numbers = #tpu.dot_dimension_numbers<[1], [0], [0], [1], [0, 0, 1, 1], [], []>} : vector<1x32xbf16>, vector<32x32xbf16>, vector<1x32xf32> -> vector<1x32xf32>
    %17 = vector.extract_strided_slice %5 {offsets = [1, 0], sizes = [1, 32], strides = [1, 1]} : vector<8x32xf32> to vector<1x32xf32>
    %18 = arith.addf %17, %16 : vector<1x32xf32>
    %19 = math.tanh %18 : vector<1x32xf32>
    %c1 = arith.constant 1 : index
    %c0_15 = arith.constant 0 : index
    %20 = vector.load %arg5[%c1, %c0_15] : memref<8x32xf32, #tpu.memory_space<vmem>>, vector<1x32xf32>
    tpu.vector_store %arg5[%c1, %c0_15], %19 {strides = array<i32>} : memref<8x32xf32, #tpu.memory_space<vmem>>, vector<1x32xf32>,
    %21 = arith.truncf %19 : vector<1x32xf32> to vector<1x32xbf16>
    %c0_16 = arith.constant 0 : index
    %c0_17 = arith.constant 0 : index
    %22 = vector.load %arg3[%c0_16, %c0_17] : memref<32x32xbf16, #tpu.memory_space<vmem>>, vector<32x32xbf16>
    %cst_18 = arith.constant dense<0.000000e+00> : vector<1x32xf32>
    %23 = tpu.matmul %21, %22, %cst_18 {dimension_numbers = #tpu.dot_dimension_numbers<[1], [0], [0], [1], [0, 0, 1, 1], [], []>} : vector<1x32xbf16>, vector<32x32xbf16>, vector<1x32xf32> -> vector<1x32xf32>
    %24 = vector.extract_strided_slice %5 {offsets = [2, 0], sizes = [1, 32], strides = [1, 1]} : vector<8x32xf32> to vector<1x32xf32>
    %25 = arith.addf %24, %23 : vector<1x32xf32>
    %26 = math.tanh %25 : vector<1x32xf32>
    %c2 = arith.constant 2 : index
    %c0_19 = arith.constant 0 : index
    %27 = vector.load %arg5[%c2, %c0_19] : memref<8x32xf32, #tpu.memory_space<vmem>>, vector<1x32xf32>
    tpu.vector_store %arg5[%c2, %c0_19], %26 {strides = array<i32>} : memref<8x32xf32, #tpu.memory_space<vmem>>, vector<1x32xf32>,
    %28 = arith.truncf %26 : vector<1x32xf32> to vector<1x32xbf16>
    %c0_20 = arith.constant 0 : index
    %c0_21 = arith.constant 0 : index
    %29 = vector.load %arg3[%c0_20, %c0_21] : memref<32x32xbf16, #tpu.memory_space<vmem>>, vector<32x32xbf16>
    %cst_22 = arith.constant dense<0.000000e+00> : vector<1x32xf32>
    %30 = tpu.matmul %28, %29, %cst_22 {dimension_numbers = #tpu.dot_dimension_numbers<[1], [0], [0], [1], [0, 0, 1, 1], [], []>} : vector<1x32xbf16>, vector<32x32xbf16>, vector<1x32xf32> -> vector<1x32xf32>
    %31 = vector.extract_strided_slice %5 {offsets = [3, 0], sizes = [1, 32], strides = [1, 1]} : vector<8x32xf32> to vector<1x32xf32>
    %32 = arith.addf %31, %30 : vector<1x32xf32>
    %33 = math.tanh %32 : vector<1x32xf32>
    %c3 = arith.constant 3 : index
    %c0_23 = arith.constant 0 : index
    %34 = vector.load %arg5[%c3, %c0_23] : memref<8x32xf32, #tpu.memory_space<vmem>>, vector<1x32xf32>
    tpu.vector_store %arg5[%c3, %c0_23], %33 {strides = array<i32>} : memref<8x32xf32, #tpu.memory_space<vmem>>, vector<1x32xf32>,
    %35 = arith.truncf %33 : vector<1x32xf32> to vector<1x32xbf16>
    %c0_24 = arith.constant 0 : index
    %c0_25 = arith.constant 0 : index
    %36 = vector.load %arg3[%c0_24, %c0_25] : memref<32x32xbf16, #tpu.memory_space<vmem>>, vector<32x32xbf16>
    %cst_26 = arith.constant dense<0.000000e+00> : vector<1x32xf32>
    %37 = tpu.matmul %35, %36, %cst_26 {dimension_numbers = #tpu.dot_dimension_numbers<[1], [0], [0], [1], [0, 0, 1, 1], [], []>} : vector<1x32xbf16>, vector<32x32xbf16>, vector<1x32xf32> -> vector<1x32xf32>
    %38 = vector.extract_strided_slice %5 {offsets = [4, 0], sizes = [1, 32], strides = [1, 1]} : vector<8x32xf32> to vector<1x32xf32>
    %39 = arith.addf %38, %37 : vector<1x32xf32>
    %40 = math.tanh %39 : vector<1x32xf32>
    %c4 = arith.constant 4 : index
    %c0_27 = arith.constant 0 : index
    %41 = vector.load %arg5[%c4, %c0_27] : memref<8x32xf32, #tpu.memory_space<vmem>>, vector<1x32xf32>
    tpu.vector_store %arg5[%c4, %c0_27], %40 {strides = array<i32>} : memref<8x32xf32, #tpu.memory_space<vmem>>, vector<1x32xf32>,
    %42 = arith.truncf %40 : vector<1x32xf32> to vector<1x32xbf16>
    %c0_28 = arith.constant 0 : index
    %c0_29 = arith.constant 0 : index
    %43 = vector.load %arg3[%c0_28, %c0_29] : memref<32x32xbf16, #tpu.memory_space<vmem>>, vector<32x32xbf16>
    %cst_30 = arith.constant dense<0.000000e+00> : vector<1x32xf32>
    %44 = tpu.matmul %42, %43, %cst_30 {dimension_numbers = #tpu.dot_dimension_numbers<[1], [0], [0], [1], [0, 0, 1, 1], [], []>} : vector<1x32xbf16>, vector<32x32xbf16>, vector<1x32xf32> -> vector<1x32xf32>
    %45 = vector.extract_strided_slice %5 {offsets = [5, 0], sizes = [1, 32], strides = [1, 1]} : vector<8x32xf32> to vector<1x32xf32>
    %46 = arith.addf %45, %44 : vector<1x32xf32>
    %47 = math.tanh %46 : vector<1x32xf32>
    %c5 = arith.constant 5 : index
    %c0_31 = arith.constant 0 : index
    %48 = vector.load %arg5[%c5, %c0_31] : memref<8x32xf32, #tpu.memory_space<vmem>>, vector<1x32xf32>
    tpu.vector_store %arg5[%c5, %c0_31], %47 {strides = array<i32>} : memref<8x32xf32, #tpu.memory_space<vmem>>, vector<1x32xf32>,
    %49 = arith.truncf %47 : vector<1x32xf32> to vector<1x32xbf16>
    %c0_32 = arith.constant 0 : index
    %c0_33 = arith.constant 0 : index
    %50 = vector.load %arg3[%c0_32, %c0_33] : memref<32x32xbf16, #tpu.memory_space<vmem>>, vector<32x32xbf16>
    %cst_34 = arith.constant dense<0.000000e+00> : vector<1x32xf32>
    %51 = tpu.matmul %49, %50, %cst_34 {dimension_numbers = #tpu.dot_dimension_numbers<[1], [0], [0], [1], [0, 0, 1, 1], [], []>} : vector<1x32xbf16>, vector<32x32xbf16>, vector<1x32xf32> -> vector<1x32xf32>
    %52 = vector.extract_strided_slice %5 {offsets = [6, 0], sizes = [1, 32], strides = [1, 1]} : vector<8x32xf32> to vector<1x32xf32>
    %53 = arith.addf %52, %51 : vector<1x32xf32>
    %54 = math.tanh %53 : vector<1x32xf32>
    %c6 = arith.constant 6 : index
    %c0_35 = arith.constant 0 : index
    %55 = vector.load %arg5[%c6, %c0_35] : memref<8x32xf32, #tpu.memory_space<vmem>>, vector<1x32xf32>
    tpu.vector_store %arg5[%c6, %c0_35], %54 {strides = array<i32>} : memref<8x32xf32, #tpu.memory_space<vmem>>, vector<1x32xf32>,
    %56 = arith.truncf %54 : vector<1x32xf32> to vector<1x32xbf16>
    %c0_36 = arith.constant 0 : index
    %c0_37 = arith.constant 0 : index
    %57 = vector.load %arg3[%c0_36, %c0_37] : memref<32x32xbf16, #tpu.memory_space<vmem>>, vector<32x32xbf16>
    %cst_38 = arith.constant dense<0.000000e+00> : vector<1x32xf32>
    %58 = tpu.matmul %56, %57, %cst_38 {dimension_numbers = #tpu.dot_dimension_numbers<[1], [0], [0], [1], [0, 0, 1, 1], [], []>} : vector<1x32xbf16>, vector<32x32xbf16>, vector<1x32xf32> -> vector<1x32xf32>
    %59 = vector.extract_strided_slice %5 {offsets = [7, 0], sizes = [1, 32], strides = [1, 1]} : vector<8x32xf32> to vector<1x32xf32>
    %60 = arith.addf %59, %58 : vector<1x32xf32>
    %61 = math.tanh %60 : vector<1x32xf32>
    %c7 = arith.constant 7 : index
    %c0_39 = arith.constant 0 : index
    %62 = vector.load %arg5[%c7, %c0_39] : memref<8x32xf32, #tpu.memory_space<vmem>>, vector<1x32xf32>
    tpu.vector_store %arg5[%c7, %c0_39], %61 {strides = array<i32>} : memref<8x32xf32, #tpu.memory_space<vmem>>, vector<1x32xf32>,
    return
  }
}

</mosaic_0001>

<llo_original>
// kernel: encoder_rnn_sequence.1
$region0: #{encoder_rnn_sequence.1}
  #allocation0 [shape = 'u32[]', space=smem, size = 0x4, offset = 0x4, fixed_abs, tag = 'smem constant byte address 0x4 - core index']
  #allocation1 [shape = 'u32[144,128]{1,0:T(1,128)}', space=vmem, size = 0x12000, scoped, tag = 'internal scratch']
  %s0 = inlined_call_operand.vmem [shape: bf16[8,32], index: 0, kind: input, shape index: {}]
  %s1 = inlined_call_operand.vmem [shape: f32[1,32], index: 1, kind: input, shape index: {}]
  %s2 = inlined_call_operand.vmem [shape: bf16[32,32], index: 2, kind: input, shape index: {}]
  %s3 = inlined_call_operand.vmem [shape: bf16[32,32], index: 3, kind: input, shape index: {}]
  %s4 = inlined_call_operand.vmem [shape: f32[1,32], index: 4, kind: input, shape index: {}]
  %s5 = inlined_call_operand.vmem [shape: f32[8,32], index: 5, kind: output, shape index: {}]
  %s6 = sld [smem:[#allocation0]]
  $region30: #{encoder_rnn_sequence.1} parent=0
    _
  %s8 = ssub.s32 1, %s6
  %s9 = scalar_select 0, %s8, %s6
  // Predicated region
  $region2: #{encoder_rnn_sequence.1} parent=0 // pred_check
    _
  $region3: #{encoder_rnn_sequence.1} parent=0 // pred_check_branch
    %11 = sbr.rel (0) target = $region5
  $region4: #{encoder_rnn_sequence.1} parent=0 // pred_region
    _
  $region5: #{encoder_rnn_sequence.1} parent=0 // pred_fallthru
    _
  // Predicated region
  $region6: #{encoder_rnn_sequence.1} parent=0 // pred_check
    _
  $region7: #{encoder_rnn_sequence.1} parent=0 // pred_check_branch
    %13 = sbr.rel (0) target = $region9
  $region8: #{encoder_rnn_sequence.1} parent=0 // pred_region
    _
  $region9: #{encoder_rnn_sequence.1} parent=0 // pred_fallthru
    _
  // Predicated region
  $region10: #{encoder_rnn_sequence.1} parent=0 // pred_check
    _
  $region11: #{encoder_rnn_sequence.1} parent=0 // pred_check_branch
    %15 = sbr.rel (0) target = $region13
  $region12: #{encoder_rnn_sequence.1} parent=0 // pred_region
    _
  $region13: #{encoder_rnn_sequence.1} parent=0 // pred_fallthru
    _
  // Predicated region
  $region14: #{encoder_rnn_sequence.1} parent=0 // pred_check
    _
  $region15: #{encoder_rnn_sequence.1} parent=0 // pred_check_branch
    %17 = sbr.rel (0) target = $region17
  $region16: #{encoder_rnn_sequence.1} parent=0 // pred_region
    _
  $region17: #{encoder_rnn_sequence.1} parent=0 // pred_fallthru
    _
  // Predicated region
  $region18: #{encoder_rnn_sequence.1} parent=0 // pred_check
    _
  $region19: #{encoder_rnn_sequence.1} parent=0 // pred_check_branch
    %19 = sbr.rel (0) target = $region21
  $region20: #{encoder_rnn_sequence.1} parent=0 // pred_region
    _
  $region21: #{encoder_rnn_sequence.1} parent=0 // pred_fallthru
    _
  %v21 = vld [vmem:[%s0] sm:$0xf]
  %v22 = vld [vmem:[%s2] sm:$0xf]
  %v23 = vld [vmem:[%s2 + $0x4] sm:$0xf]
  %v24 = vld [vmem:[%s2 + $0x8] sm:$0xf]
  %v25 = vld [vmem:[%s2 + $0xc] sm:$0xf]
  %v26 = vld [vmem:[%s4] sm:$0x1]
  %v28 = vlaneseq
  %v29 = vshrl.u32 %v28, 7
  %v30 = vsub.s32 0, %v29
  %v31 = vrot.slane %v26, %v30
  %v37 = vunpack.c.l.b16 %v22
  %v38 = vunpack.c.l.b16 %v23
  %v39 = vunpack.c.l.b16 %v24
  %v40 = vunpack.c.l.b16 %v25
  %v41 = vpack.c.b16 %v38, %v37
  %v42 = vpack.c.b16 %v40, %v39
  %vm45 = vcmask 261120
  %v47 = vsel %vm45, %v21, 0
  %49 = vmatprep.subr.bf16.mxu0 0
  %50 = vmatpush1.bf16.msra.mxu0 %v41
  %51 = vmatprep.subr.bf16.mxu0 0
  %52 = vmatpush1.bf16.msra.mxu0 %v42
  %53 = vmatprep.subr.bf16.mxu0 0
  %54 = vmatpush1.bf16.msra.mxu0 0
  %55 = vmatprep.subr.bf16.mxu0 0
  %56 = vmatpush1.bf16.msra.mxu0 0
  %57 = vmatprep.subr.bf16.mxu0 0
  %58 = vmatpush1.bf16.msra.mxu0 0
  %59 = vmatprep.subr.bf16.mxu0 0
  %60 = vmatpush1.bf16.msra.mxu0 0
  %61 = vmatprep.subr.bf16.mxu0 0
  %62 = vmatpush1.bf16.msra.mxu0 0
  %63 = vmatprep.subr.bf16.mxu0 0
  %64 = vmatpush1.bf16.msra.mxu0 0
  %65 = vmatprep.subr.bf16.mxu0 0
  %66 = vmatpush1.bf16.msra.mxu0 0
  %67 = vmatprep.subr.bf16.mxu0 0
  %68 = vmatpush1.bf16.msra.mxu0 0
  %69 = vmatprep.subr.bf16.mxu0 0
  %70 = vmatpush1.bf16.msra.mxu0 0
  %71 = vmatprep.subr.bf16.mxu0 0
  %72 = vmatpush1.bf16.msra.mxu0 0
  %73 = vmatprep.subr.bf16.mxu0 0
  %74 = vmatpush1.bf16.msra.mxu0 0
  %75 = vmatprep.subr.bf16.mxu0 0
  %76 = vmatpush1.bf16.msra.mxu0 0
  %77 = vmatprep.subr.bf16.mxu0 0
  %78 = vmatpush1.bf16.msra.mxu0 0
  %79 = vmatprep.subr.bf16.mxu0 0
  %80 = vmatpush1.bf16.msra.mxu0 0
  %81 = vmatprep.mubr.bf16.mxu0 0
  %82 = vmatmul.mubr.bf16.gmra.mrb[0].mxu0 %v47
  %v83 = vpop.f32.mrb[0].mxu0
  %v84 = vadd.f32 %v31, %v83
  %v85 = vpop.f32.mrb[0].mxu0
  %v86 = vpop.f32.mrb[0].mxu0
  %v87 = vpop.f32.mrb[0].mxu0
  %88 = vdwg.mxu0
  %v89 = vld [vmem:[%s1] sm:$0x1]
  %v90 = vpack.c.bf16 %v89, %v89
  %v91 = vld [vmem:[%s3] sm:$0xf]
  %v92 = vld [vmem:[%s3 + $0x4] sm:$0xf]
  %v93 = vld [vmem:[%s3 + $0x8] sm:$0xf]
  %v94 = vld [vmem:[%s3 + $0xc] sm:$0xf]
  %v99 = vunpack.c.l.b16 %v91
  %v100 = vunpack.c.l.b16 %v92
  %v101 = vunpack.c.l.b16 %v93
  %v102 = vunpack.c.l.b16 %v94
  %v103 = vpack.c.b16 %v100, %v99
  %v104 = vpack.c.b16 %v102, %v101
  %v108 = vsel %vm45, %v90, 0
  %110 = vmatprep.subr.bf16.mxu0 0
  %111 = vmatpush1.bf16.msra.mxu0 %v103
  %112 = vmatprep.subr.bf16.mxu0 0
  %113 = vmatpush1.bf16.msra.mxu0 %v104
  %114 = vmatprep.subr.bf16.mxu0 0
  %115 = vmatpush1.bf16.msra.mxu0 0
  %116 = vmatprep.subr.bf16.mxu0 0
  %117 = vmatpush1.bf16.msra.mxu0 0
  %118 = vmatprep.subr.bf16.mxu0 0
  %119 = vmatpush1.bf16.msra.mxu0 0
  %120 = vmatprep.subr.bf16.mxu0 0
  %121 = vmatpush1.bf16.msra.mxu0 0
  %122 = vmatprep.subr.bf16.mxu0 0
  %123 = vmatpush1.bf16.msra.mxu0 0
  %124 = vmatprep.subr.bf16.mxu0 0
  %125 = vmatpush1.bf16.msra.mxu0 0
  %126 = vmatprep.subr.bf16.mxu0 0
  %127 = vmatpush1.bf16.msra.mxu0 0
  %128 = vmatprep.subr.bf16.mxu0 0
  %129 = vmatpush1.bf16.msra.mxu0 0
  %130 = vmatprep.subr.bf16.mxu0 0
  %131 = vmatpush1.bf16.msra.mxu0 0
  %132 = vmatprep.subr.bf16.mxu0 0
  %133 = vmatpush1.bf16.msra.mxu0 0
  %134 = vmatprep.subr.bf16.mxu0 0
  %135 = vmatpush1.bf16.msra.mxu0 0
  %136 = vmatprep.subr.bf16.mxu0 0
  %137 = vmatpush1.bf16.msra.mxu0 0
  %138 = vmatprep.subr.bf16.mxu0 0
  %139 = vmatpush1.bf16.msra.mxu0 0
  %140 = vmatprep.subr.bf16.mxu0 0
  %141 = vmatpush1.bf16.msra.mxu0 0
  %142 = vmatprep.mubr.bf16.mxu0 0
  %143 = vmatmul.mubr.bf16.gmra.mrb[0].mxu0 %v108
  %v144 = vpop.f32.mrb[0].mxu0
  %v145 = vadd.f32 0.0, %v144
  %v146 = vpop.f32.mrb[0].mxu0
  %v147 = vpop.f32.mrb[0].mxu0
  %v148 = vpop.f32.mrb[0].mxu0
  %149 = vdwg.mxu0
  %v150 = vadd.f32 %v84, %v145
  %v151 = vtanh.pop %v150
  %vm152 = vcmask 253952
  %153 = vst.msk [vmem:[%s5] sm:$0x1] %vm152, %v151
  %v154 = vpack.c.bf16 %v151, %v151
  %v155 = vld [vmem:[%s3] sm:$0xf]
  %v156 = vld [vmem:[%s3 + $0x4] sm:$0xf]
  %v157 = vld [vmem:[%s3 + $0x8] sm:$0xf]
  %v158 = vld [vmem:[%s3 + $0xc] sm:$0xf]
  %v163 = vunpack.c.l.b16 %v155
  %v164 = vunpack.c.l.b16 %v156
  %v165 = vunpack.c.l.b16 %v157
  %v166 = vunpack.c.l.b16 %v158
  %v167 = vpack.c.b16 %v164, %v163
  %v168 = vpack.c.b16 %v166, %v165
  %v172 = vsel %vm45, %v154, 0
  %174 = vmatprep.subr.bf16.mxu0 0
  %175 = vmatpush1.bf16.msra.mxu0 %v167
  %176 = vmatprep.subr.bf16.mxu0 0
  %177 = vmatpush1.bf16.msra.mxu0 %v168
  %178 = vmatprep.subr.bf16.mxu0 0
  %179 = vmatpush1.bf16.msra.mxu0 0
  %180 = vmatprep.subr.bf16.mxu0 0
  %181 = vmatpush1.bf16.msra.mxu0 0
  %182 = vmatprep.subr.bf16.mxu0 0
  %183 = vmatpush1.bf16.msra.mxu0 0
  %184 = vmatprep.subr.bf16.mxu0 0
  %185 = vmatpush1.bf16.msra.mxu0 0
  %186 = vmatprep.subr.bf16.mxu0 0
  %187 = vmatpush1.bf16.msra.mxu0 0
  %188 = vmatprep.subr.bf16.mxu0 0
  %189 = vmatpush1.bf16.msra.mxu0 0
  %190 = vmatprep.subr.bf16.mxu0 0
  %191 = vmatpush1.bf16.msra.mxu0 0
  %192 = vmatprep.subr.bf16.mxu0 0
  %193 = vmatpush1.bf16.msra.mxu0 0
  %194 = vmatprep.subr.bf16.mxu0 0
  %195 = vmatpush1.bf16.msra.mxu0 0
  %196 = vmatprep.subr.bf16.mxu0 0
  %197 = vmatpush1.bf16.msra.mxu0 0
  %198 = vmatprep.subr.bf16.mxu0 0
  %199 = vmatpush1.bf16.msra.mxu0 0
  %200 = vmatprep.subr.bf16.mxu0 0
  %201 = vmatpush1.bf16.msra.mxu0 0
  %202 = vmatprep.subr.bf16.mxu0 0
  %203 = vmatpush1.bf16.msra.mxu0 0
  %204 = vmatprep.subr.bf16.mxu0 0
  %205 = vmatpush1.bf16.msra.mxu0 0
  %206 = vmatprep.mubr.bf16.mxu0 0
  %207 = vmatmul.mubr.bf16.gmra.mrb[0].mxu0 %v172
  %v208 = vpop.f32.mrb[0].mxu0
  %v209 = vadd.f32 0.0, %v208
  %v210 = vpop.f32.mrb[0].mxu0
  %v211 = vpop.f32.mrb[0].mxu0
  %v212 = vpop.f32.mrb[0].mxu0
  %213 = vdwg.mxu0
  %v215 = vrot.slane %v209, 7
  %v217 = vadd.f32 %v84, %v215
  %v218 = vtanh.pop %v217
  %vm219 = vcmask 254977
  %220 = vst.msk [vmem:[%s5] sm:$0x2] %vm219, %v218
  %v221 = vpack.c.bf16 %v218, %v218
  %v222 = vld [vmem:[%s3] sm:$0xf]
  %v223 = vld [vmem:[%s3 + $0x4] sm:$0xf]
  %v224 = vld [vmem:[%s3 + $0x8] sm:$0xf]
  %v225 = vld [vmem:[%s3 + $0xc] sm:$0xf]
  %v227 = vshrl.u32 %v221, 16
  %v233 = vunpack.c.l.b16 %v222
  %v234 = vunpack.c.l.b16 %v223
  %v235 = vunpack.c.l.b16 %v224
  %v236 = vunpack.c.l.b16 %v225
  %v237 = vpack.c.b16 %v234, %v233
  %v238 = vpack.c.b16 %v236, %v235
  %v242 = vsel %vm45, %v227, 0
  %244 = vmatprep.subr.bf16.mxu0 0
  %245 = vmatpush1.bf16.msra.mxu0 %v237
  %246 = vmatprep.subr.bf16.mxu0 0
  %247 = vmatpush1.bf16.msra.mxu0 %v238
  %248 = vmatprep.subr.bf16.mxu0 0
  %249 = vmatpush1.bf16.msra.mxu0 0
  %250 = vmatprep.subr.bf16.mxu0 0
  %251 = vmatpush1.bf16.msra.mxu0 0
  %252 = vmatprep.subr.bf16.mxu0 0
  %253 = vmatpush1.bf16.msra.mxu0 0
  %254 = vmatprep.subr.bf16.mxu0 0
  %255 = vmatpush1.bf16.msra.mxu0 0
  %256 = vmatprep.subr.bf16.mxu0 0
  %257 = vmatpush1.bf16.msra.mxu0 0
  %258 = vmatprep.subr.bf16.mxu0 0
  %259 = vmatpush1.bf16.msra.mxu0 0
  %260 = vmatprep.subr.bf16.mxu0 0
  %261 = vmatpush1.bf16.msra.mxu0 0
  %262 = vmatprep.subr.bf16.mxu0 0
  %263 = vmatpush1.bf16.msra.mxu0 0
  %264 = vmatprep.subr.bf16.mxu0 0
  %265 = vmatpush1.bf16.msra.mxu0 0
  %266 = vmatprep.subr.bf16.mxu0 0
  %267 = vmatpush1.bf16.msra.mxu0 0
  %268 = vmatprep.subr.bf16.mxu0 0
  %269 = vmatpush1.bf16.msra.mxu0 0
  %270 = vmatprep.subr.bf16.mxu0 0
  %271 = vmatpush1.bf16.msra.mxu0 0
  %272 = vmatprep.subr.bf16.mxu0 0
  %273 = vmatpush1.bf16.msra.mxu0 0
  %274 = vmatprep.subr.bf16.mxu0 0
  %275 = vmatpush1.bf16.msra.mxu0 0
  %276 = vmatprep.mubr.bf16.mxu0 0
  %277 = vmatmul.mubr.bf16.gmra.mrb[0].mxu0 %v242
  %v278 = vpop.f32.mrb[0].mxu0
  %v279 = vadd.f32 0.0, %v278
  %v280 = vpop.f32.mrb[0].mxu0
  %v281 = vpop.f32.mrb[0].mxu0
  %v282 = vpop.f32.mrb[0].mxu0
  %283 = vdwg.mxu0
  %v285 = vrot.slane %v279, 6
  %v287 = vadd.f32 %v84, %v285
  %v288 = vtanh.pop %v287
  %vm289 = vcmask 256002
  %290 = vst.msk [vmem:[%s5] sm:$0x4] %vm289, %v288
  %v291 = vpack.c.bf16 %v288, %v288
  %v292 = vld [vmem:[%s3] sm:$0xf]
  %v293 = vld [vmem:[%s3 + $0x4] sm:$0xf]
  %v294 = vld [vmem:[%s3 + $0x8] sm:$0xf]
  %v295 = vld [vmem:[%s3 + $0xc] sm:$0xf]
  %v297 = vrot.slane %v291, 1
  %v302 = vunpack.c.l.b16 %v292
  %v303 = vunpack.c.l.b16 %v293
  %v304 = vunpack.c.l.b16 %v294
  %v305 = vunpack.c.l.b16 %v295
  %v306 = vpack.c.b16 %v303, %v302
  %v307 = vpack.c.b16 %v305, %v304
  %v311 = vsel %vm45, %v297, 0
  %313 = vmatprep.subr.bf16.mxu0 0
  %314 = vmatpush1.bf16.msra.mxu0 %v306
  %315 = vmatprep.subr.bf16.mxu0 0
  %316 = vmatpush1.bf16.msra.mxu0 %v307
  %317 = vmatprep.subr.bf16.mxu0 0
  %318 = vmatpush1.bf16.msra.mxu0 0
  %319 = vmatprep.subr.bf16.mxu0 0
  %320 = vmatpush1.bf16.msra.mxu0 0
  %321 = vmatprep.subr.bf16.mxu0 0
  %322 = vmatpush1.bf16.msra.mxu0 0
  %323 = vmatprep.subr.bf16.mxu0 0
  %324 = vmatpush1.bf16.msra.mxu0 0
  %325 = vmatprep.subr.bf16.mxu0 0
  %326 = vmatpush1.bf16.msra.mxu0 0
  %327 = vmatprep.subr.bf16.mxu0 0
  %328 = vmatpush1.bf16.msra.mxu0 0
  %329 = vmatprep.subr.bf16.mxu0 0
  %330 = vmatpush1.bf16.msra.mxu0 0
  %331 = vmatprep.subr.bf16.mxu0 0
  %332 = vmatpush1.bf16.msra.mxu0 0
  %333 = vmatprep.subr.bf16.mxu0 0
  %334 = vmatpush1.bf16.msra.mxu0 0
  %335 = vmatprep.subr.bf16.mxu0 0
  %336 = vmatpush1.bf16.msra.mxu0 0
  %337 = vmatprep.subr.bf16.mxu0 0
  %338 = vmatpush1.bf16.msra.mxu0 0
  %339 = vmatprep.subr.bf16.mxu0 0
  %340 = vmatpush1.bf16.msra.mxu0 0
  %341 = vmatprep.subr.bf16.mxu0 0
  %342 = vmatpush1.bf16.msra.mxu0 0
  %343 = vmatprep.subr.bf16.mxu0 0
  %344 = vmatpush1.bf16.msra.mxu0 0
  %345 = vmatprep.mubr.bf16.mxu0 0
  %346 = vmatmul.mubr.bf16.gmra.mrb[0].mxu0 %v311
  %v347 = vpop.f32.mrb[0].mxu0
  %v348 = vadd.f32 0.0, %v347
  %v349 = vpop.f32.mrb[0].mxu0
  %v350 = vpop.f32.mrb[0].mxu0
  %v351 = vpop.f32.mrb[0].mxu0
  %352 = vdwg.mxu0
  %v354 = vrot.slane %v348, 5
  %v356 = vadd.f32 %v84, %v354
  %v357 = vtanh.pop %v356
  %vm358 = vcmask 257027
  %359 = vst.msk [vmem:[%s5] sm:$0x8] %vm358, %v357
  %v360 = vpack.c.bf16 %v357, %v357
  %v361 = vld [vmem:[%s3] sm:$0xf]
  %v362 = vld [vmem:[%s3 + $0x4] sm:$0xf]
  %v363 = vld [vmem:[%s3 + $0x8] sm:$0xf]
  %v364 = vld [vmem:[%s3 + $0xc] sm:$0xf]
  %v366 = vshrl.u32 %v360, 16
  %v368 = vrot.slane %v366, 1
  %v373 = vunpack.c.l.b16 %v361
  %v374 = vunpack.c.l.b16 %v362
  %v375 = vunpack.c.l.b16 %v363
  %v376 = vunpack.c.l.b16 %v364
  %v377 = vpack.c.b16 %v374, %v373
  %v378 = vpack.c.b16 %v376, %v375
  %v382 = vsel %vm45, %v368, 0
  %384 = vmatprep.subr.bf16.mxu0 0
  %385 = vmatpush1.bf16.msra.mxu0 %v377
  %386 = vmatprep.subr.bf16.mxu0 0
  %387 = vmatpush1.bf16.msra.mxu0 %v378
  %388 = vmatprep.subr.bf16.mxu0 0
  %389 = vmatpush1.bf16.msra.mxu0 0
  %390 = vmatprep.subr.bf16.mxu0 0
  %391 = vmatpush1.bf16.msra.mxu0 0
  %392 = vmatprep.subr.bf16.mxu0 0
  %393 = vmatpush1.bf16.msra.mxu0 0
  %394 = vmatprep.subr.bf16.mxu0 0
  %395 = vmatpush1.bf16.msra.mxu0 0
  %396 = vmatprep.subr.bf16.mxu0 0
  %397 = vmatpush1.bf16.msra.mxu0 0
  %398 = vmatprep.subr.bf16.mxu0 0
  %399 = vmatpush1.bf16.msra.mxu0 0
  %400 = vmatprep.subr.bf16.mxu0 0
  %401 = vmatpush1.bf16.msra.mxu0 0
  %402 = vmatprep.subr.bf16.mxu0 0
  %403 = vmatpush1.bf16.msra.mxu0 0
  %404 = vmatprep.subr.bf16.mxu0 0
  %405 = vmatpush1.bf16.msra.mxu0 0
  %406 = vmatprep.subr.bf16.mxu0 0
  %407 = vmatpush1.bf16.msra.mxu0 0
  %408 = vmatprep.subr.bf16.mxu0 0
  %409 = vmatpush1.bf16.msra.mxu0 0
  %410 = vmatprep.subr.bf16.mxu0 0
  %411 = vmatpush1.bf16.msra.mxu0 0
  %412 = vmatprep.subr.bf16.mxu0 0
  %413 = vmatpush1.bf16.msra.mxu0 0
  %414 = vmatprep.subr.bf16.mxu0 0
  %415 = vmatpush1.bf16.msra.mxu0 0
  %416 = vmatprep.mubr.bf16.mxu0 0
  %417 = vmatmul.mubr.bf16.gmra.mrb[0].mxu0 %v382
  %v418 = vpop.f32.mrb[0].mxu0
  %v419 = vadd.f32 0.0, %v418
  %v420 = vpop.f32.mrb[0].mxu0
  %v421 = vpop.f32.mrb[0].mxu0
  %v422 = vpop.f32.mrb[0].mxu0
  %423 = vdwg.mxu0
  %v425 = vrot.slane %v419, 4
  %v427 = vadd.f32 %v84, %v425
  %v428 = vtanh.pop %v427
  %vm429 = vcmask 258052
  %430 = vst.msk [vmem:[%s5] sm:$0x10] %vm429, %v428
  %v431 = vpack.c.bf16 %v428, %v428
  %v432 = vld [vmem:[%s3] sm:$0xf]
  %v433 = vld [vmem:[%s3 + $0x4] sm:$0xf]
  %v434 = vld [vmem:[%s3 + $0x8] sm:$0xf]
  %v435 = vld [vmem:[%s3 + $0xc] sm:$0xf]
  %v437 = vrot.slane %v431, 2
  %v442 = vunpack.c.l.b16 %v432
  %v443 = vunpack.c.l.b16 %v433
  %v444 = vunpack.c.l.b16 %v434
  %v445 = vunpack.c.l.b16 %v435
  %v446 = vpack.c.b16 %v443, %v442
  %v447 = vpack.c.b16 %v445, %v444
  %v451 = vsel %vm45, %v437, 0
  %453 = vmatprep.subr.bf16.mxu0 0
  %454 = vmatpush1.bf16.msra.mxu0 %v446
  %455 = vmatprep.subr.bf16.mxu0 0
  %456 = vmatpush1.bf16.msra.mxu0 %v447
  %457 = vmatprep.subr.bf16.mxu0 0
  %458 = vmatpush1.bf16.msra.mxu0 0
  %459 = vmatprep.subr.bf16.mxu0 0
  %460 = vmatpush1.bf16.msra.mxu0 0
  %461 = vmatprep.subr.bf16.mxu0 0
  %462 = vmatpush1.bf16.msra.mxu0 0
  %463 = vmatprep.subr.bf16.mxu0 0
  %464 = vmatpush1.bf16.msra.mxu0 0
  %465 = vmatprep.subr.bf16.mxu0 0
  %466 = vmatpush1.bf16.msra.mxu0 0
  %467 = vmatprep.subr.bf16.mxu0 0
  %468 = vmatpush1.bf16.msra.mxu0 0
  %469 = vmatprep.subr.bf16.mxu0 0
  %470 = vmatpush1.bf16.msra.mxu0 0
  %471 = vmatprep.subr.bf16.mxu0 0
  %472 = vmatpush1.bf16.msra.mxu0 0
  %473 = vmatprep.subr.bf16.mxu0 0
  %474 = vmatpush1.bf16.msra.mxu0 0
  %475 = vmatprep.subr.bf16.mxu0 0
  %476 = vmatpush1.bf16.msra.mxu0 0
  %477 = vmatprep.subr.bf16.mxu0 0
  %478 = vmatpush1.bf16.msra.mxu0 0
  %479 = vmatprep.subr.bf16.mxu0 0
  %480 = vmatpush1.bf16.msra.mxu0 0
  %481 = vmatprep.subr.bf16.mxu0 0
  %482 = vmatpush1.bf16.msra.mxu0 0
  %483 = vmatprep.subr.bf16.mxu0 0
  %484 = vmatpush1.bf16.msra.mxu0 0
  %485 = vmatprep.mubr.bf16.mxu0 0
  %486 = vmatmul.mubr.bf16.gmra.mrb[0].mxu0 %v451
  %v487 = vpop.f32.mrb[0].mxu0
  %v488 = vadd.f32 0.0, %v487
  %v489 = vpop.f32.mrb[0].mxu0
  %v490 = vpop.f32.mrb[0].mxu0
  %v491 = vpop.f32.mrb[0].mxu0
  %492 = vdwg.mxu0
  %v494 = vrot.slane %v488, 3
  %v496 = vadd.f32 %v84, %v494
  %v497 = vtanh.pop %v496
  %vm498 = vcmask 259077
  %499 = vst.msk [vmem:[%s5] sm:$0x20] %vm498, %v497
  %v500 = vpack.c.bf16 %v497, %v497
  %v501 = vld [vmem:[%s3] sm:$0xf]
  %v502 = vld [vmem:[%s3 + $0x4] sm:$0xf]
  %v503 = vld [vmem:[%s3 + $0x8] sm:$0xf]
  %v504 = vld [vmem:[%s3 + $0xc] sm:$0xf]
  %v506 = vshrl.u32 %v500, 16
  %v508 = vrot.slane %v506, 2
  %v513 = vunpack.c.l.b16 %v501
  %v514 = vunpack.c.l.b16 %v502
  %v515 = vunpack.c.l.b16 %v503
  %v516 = vunpack.c.l.b16 %v504
  %v517 = vpack.c.b16 %v514, %v513
  %v518 = vpack.c.b16 %v516, %v515
  %v522 = vsel %vm45, %v508, 0
  %524 = vmatprep.subr.bf16.mxu0 0
  %525 = vmatpush1.bf16.msra.mxu0 %v517
  %526 = vmatprep.subr.bf16.mxu0 0
  %527 = vmatpush1.bf16.msra.mxu0 %v518
  %528 = vmatprep.subr.bf16.mxu0 0
  %529 = vmatpush1.bf16.msra.mxu0 0
  %530 = vmatprep.subr.bf16.mxu0 0
  %531 = vmatpush1.bf16.msra.mxu0 0
  %532 = vmatprep.subr.bf16.mxu0 0
  %533 = vmatpush1.bf16.msra.mxu0 0
  %534 = vmatprep.subr.bf16.mxu0 0
  %535 = vmatpush1.bf16.msra.mxu0 0
  %536 = vmatprep.subr.bf16.mxu0 0
  %537 = vmatpush1.bf16.msra.mxu0 0
  %538 = vmatprep.subr.bf16.mxu0 0
  %539 = vmatpush1.bf16.msra.mxu0 0
  %540 = vmatprep.subr.bf16.mxu0 0
  %541 = vmatpush1.bf16.msra.mxu0 0
  %542 = vmatprep.subr.bf16.mxu0 0
  %543 = vmatpush1.bf16.msra.mxu0 0
  %544 = vmatprep.subr.bf16.mxu0 0
  %545 = vmatpush1.bf16.msra.mxu0 0
  %546 = vmatprep.subr.bf16.mxu0 0
  %547 = vmatpush1.bf16.msra.mxu0 0
  %548 = vmatprep.subr.bf16.mxu0 0
  %549 = vmatpush1.bf16.msra.mxu0 0
  %550 = vmatprep.subr.bf16.mxu0 0
  %551 = vmatpush1.bf16.msra.mxu0 0
  %552 = vmatprep.subr.bf16.mxu0 0
  %553 = vmatpush1.bf16.msra.mxu0 0
  %554 = vmatprep.subr.bf16.mxu0 0
  %555 = vmatpush1.bf16.msra.mxu0 0
  %556 = vmatprep.mubr.bf16.mxu0 0
  %557 = vmatmul.mubr.bf16.gmra.mrb[0].mxu0 %v522
  %v558 = vpop.f32.mrb[0].mxu0
  %v559 = vadd.f32 0.0, %v558
  %v560 = vpop.f32.mrb[0].mxu0
  %v561 = vpop.f32.mrb[0].mxu0
  %v562 = vpop.f32.mrb[0].mxu0
  %563 = vdwg.mxu0
  %v565 = vrot.slane %v559, 2
  %v567 = vadd.f32 %v84, %v565
  %v568 = vtanh.pop %v567
  %vm569 = vcmask 260102
  %570 = vst.msk [vmem:[%s5] sm:$0x40] %vm569, %v568
  %v571 = vpack.c.bf16 %v568, %v568
  %v572 = vld [vmem:[%s3] sm:$0xf]
  %v573 = vld [vmem:[%s3 + $0x4] sm:$0xf]
  %v574 = vld [vmem:[%s3 + $0x8] sm:$0xf]
  %v575 = vld [vmem:[%s3 + $0xc] sm:$0xf]
  %v577 = vrot.slane %v571, 3
  %v582 = vunpack.c.l.b16 %v572
  %v583 = vunpack.c.l.b16 %v573
  %v584 = vunpack.c.l.b16 %v574
  %v585 = vunpack.c.l.b16 %v575
  %v586 = vpack.c.b16 %v583, %v582
  %v587 = vpack.c.b16 %v585, %v584
  %v591 = vsel %vm45, %v577, 0
  %593 = vmatprep.subr.bf16.mxu0 0
  %594 = vmatpush1.bf16.msra.mxu0 %v586
  %595 = vmatprep.subr.bf16.mxu0 0
  %596 = vmatpush1.bf16.msra.mxu0 %v587
  %597 = vmatprep.subr.bf16.mxu0 0
  %598 = vmatpush1.bf16.msra.mxu0 0
  %599 = vmatprep.subr.bf16.mxu0 0
  %600 = vmatpush1.bf16.msra.mxu0 0
  %601 = vmatprep.subr.bf16.mxu0 0
  %602 = vmatpush1.bf16.msra.mxu0 0
  %603 = vmatprep.subr.bf16.mxu0 0
  %604 = vmatpush1.bf16.msra.mxu0 0
  %605 = vmatprep.subr.bf16.mxu0 0
  %606 = vmatpush1.bf16.msra.mxu0 0
  %607 = vmatprep.subr.bf16.mxu0 0
  %608 = vmatpush1.bf16.msra.mxu0 0
  %609 = vmatprep.subr.bf16.mxu0 0
  %610 = vmatpush1.bf16.msra.mxu0 0
  %611 = vmatprep.subr.bf16.mxu0 0
  %612 = vmatpush1.bf16.msra.mxu0 0
  %613 = vmatprep.subr.bf16.mxu0 0
  %614 = vmatpush1.bf16.msra.mxu0 0
  %615 = vmatprep.subr.bf16.mxu0 0
  %616 = vmatpush1.bf16.msra.mxu0 0
  %617 = vmatprep.subr.bf16.mxu0 0
  %618 = vmatpush1.bf16.msra.mxu0 0
  %619 = vmatprep.subr.bf16.mxu0 0
  %620 = vmatpush1.bf16.msra.mxu0 0
  %621 = vmatprep.subr.bf16.mxu0 0
  %622 = vmatpush1.bf16.msra.mxu0 0
  %623 = vmatprep.subr.bf16.mxu0 0
  %624 = vmatpush1.bf16.msra.mxu0 0
  %625 = vmatprep.mubr.bf16.mxu0 0
  %626 = vmatmul.mubr.bf16.gmra.mrb[0].mxu0 %v591
  %v627 = vpop.f32.mrb[0].mxu0
  %v628 = vadd.f32 0.0, %v627
  %v629 = vpop.f32.mrb[0].mxu0
  %v630 = vpop.f32.mrb[0].mxu0
  %v631 = vpop.f32.mrb[0].mxu0
  %632 = vdwg.mxu0
  %v634 = vrot.slane %v628, 1
  %v636 = vadd.f32 %v84, %v634
  %v637 = vtanh.pop %v636
  %vm638 = vcmask 261127
  %639 = vst.msk [vmem:[%s5] sm:$0x80] %vm638, %v637
  // Predicated region
  $region22: #{encoder_rnn_sequence.1} parent=0 // pred_check
    _
  $region23: #{encoder_rnn_sequence.1} parent=0 // pred_check_branch
    %641 = sbr.rel (0) target = $region25
  $region24: #{encoder_rnn_sequence.1} parent=0 // pred_region
    _
  $region25: #{encoder_rnn_sequence.1} parent=0 // pred_fallthru
    _
  // Predicated region
  $region26: #{encoder_rnn_sequence.1} parent=0 // pred_check
    _
  $region27: #{encoder_rnn_sequence.1} parent=0 // pred_check_branch
    %643 = sbr.rel (0) target = $region29
  $region28: #{encoder_rnn_sequence.1} parent=0 // pred_region
    _
  $region29: #{encoder_rnn_sequence.1} parent=0 // pred_fallthru
    _

</llo_original>
